<compile_context>
chip_gen: v7x
topology: tpu7x:2x2x1
jax: 0.10.0
libtpu: 0.0.40
codegen_flags: <defaults>
</compile_context>

<pallas_src>
import jax
import jax.numpy as jnp
from jax.experimental import pallas as pl
from jax.experimental.pallas import tpu as pltpu


def _round_up(a, b):
    return (a + b - 1) // b * b


def _gating_kernel(x_ref, w1_ref, b1_ref, w2_ref, b2_ref, o_ref):
    # x_ref : [TN, L]  bf16   (tiled over the grid, auto double-buffered)
    # w1_ref: [L, D]   bf16   b1_ref: [1, D] f32   (VMEM-resident across steps)
    # w2_ref: [D, E]   bf16   b2_ref: [1, E] f32   (VMEM-resident across steps)
    # o_ref : [TN, E]  f32    (last block dim == full array dim -> contiguous
    #                          HBM writeback, no lane padding in HBM)

    # fc1 + ReLU: bf16 operands, f32 MXU accumulation
    h = jnp.dot(x_ref[...], w1_ref[...],
                preferred_element_type=jnp.float32) + b1_ref[...]
    h = jnp.maximum(h, 0.0)

    # fc2: cast the activation back to bf16 for the MXU, accumulate in f32
    logits = jnp.dot(h.astype(jnp.bfloat16), w2_ref[...],
                     preferred_element_type=jnp.float32) + b2_ref[...]

    # numerically-stable softmax, all f32 (v5e has no bf16 VPU/EUP).  Exact
    # normalization (kernel is HBM-bound, exact reciprocal is free) so the
    # gates sum to 1 to float rounding.
    m = jnp.max(logits, axis=-1, keepdims=True)
    e = jnp.exp(logits - m)
    denom = jnp.sum(e, axis=-1, keepdims=True)
    o_ref[...] = (e / denom).astype(o_ref.dtype)


def prepare_gating_params(w1, b1, w2, b2):
    """One-time parameter prep (casts / reshapes), hoisted out of the hot path."""
    return {
        "w1": w1.astype(jnp.bfloat16),            # [L, D]
        "b1": b1.reshape(1, -1).astype(jnp.float32),  # [1, D]
        "w2": w2.astype(jnp.bfloat16),            # [D, E]
        "b2": b2.reshape(1, -1).astype(jnp.float32),  # [1, E]
    }


def gating_network(x, params, *, tile_n=4096):
    """x: [..., input_len] -> gating probabilities [..., num_experts] (f32)."""
    w1, b1, w2, b2 = params["w1"], params["b1"], params["w2"], params["b2"]
    lead_shape = x.shape[:-1]
    L = x.shape[-1]
    D = w1.shape[1]
    E = w2.shape[1]

    x2d = x.reshape(-1, L).astype(jnp.bfloat16)
    N = x2d.shape[0]

    # Row tile: multiple of 16 (bf16 packs two rows per sublane).  Prefer >=2
    # grid steps when N allows it (so the "parallel" axis spans both v7x
    # TensorCores); cap at tile_n so double-buffered x/out tiles (+ f32
    # intermediates) stay comfortably under the 32 MiB scoped-VMEM default.
    TN = min(tile_n, _round_up(max(pl.cdiv(N, 2), 16), 16))
    N_pad = _round_up(N, TN)
    if N_pad != N:
        x2d = jnp.pad(x2d, ((0, N_pad - N), (0, 0)))

    out = pl.pallas_call(
        _gating_kernel,
        out_shape=jax.ShapeDtypeStruct((N_pad, E), jnp.float32),
        grid=(N_pad // TN,),
        in_specs=[
            pl.BlockSpec((TN, L), lambda i: (i, 0)),   # x : tiled over rows
            pl.BlockSpec((L, D), lambda i: (0, 0)),    # w1: resident
            pl.BlockSpec((1, D), lambda i: (0, 0)),    # b1: resident
            pl.BlockSpec((D, E), lambda i: (0, 0)),    # w2: resident
            pl.BlockSpec((1, E), lambda i: (0, 0)),    # b2: resident
        ],
        out_specs=pl.BlockSpec((TN, E), lambda i: (i, 0)),
        compiler_params=pltpu.CompilerParams(
            dimension_semantics=("parallel",)),
    )(x2d, w1, b1, w2, b2)

    return out[:N].reshape(*lead_shape, E)


if __name__ == "__main__":
    # configs: input_len=16, d_model=32, num_experts=4
    INPUT_LEN, D_MODEL, NUM_EXPERTS = 16, 32, 4
    BATCH, NODES = 2, 8  # leading dims of x, flattened inside the wrapper

    key = jax.random.PRNGKey(0)
    kx, kw1, kb1, kw2, kb2 = jax.random.split(key, 5)

    x = jax.random.normal(kx, (BATCH, NODES, INPUT_LEN), dtype=jnp.float32)
    # deterministic parameter init (synthetic; not a checkpoint load)
    w1 = jax.random.normal(kw1, (INPUT_LEN, D_MODEL), dtype=jnp.float32) * 0.1
    b1 = jax.random.normal(kb1, (D_MODEL,), dtype=jnp.float32) * 0.01
    w2 = jax.random.normal(kw2, (D_MODEL, NUM_EXPERTS), dtype=jnp.float32) * 0.1
    b2 = jax.random.normal(kb2, (NUM_EXPERTS,), dtype=jnp.float32) * 0.01

    params = prepare_gating_params(w1, b1, w2, b2)   # once per parameter set
    gates = gating_network(x, params)
    jax.block_until_ready(gates)

    # pure-f32 reference; bf16 matmul operands keep the error well inside 1e-2
    h_ref = jnp.maximum(x @ w1 + b1, 0.0)
    ref = jax.nn.softmax(h_ref @ w2 + b2, axis=-1)
    assert gates.shape == (BATCH, NODES, NUM_EXPERTS)
    assert jnp.allclose(gates, ref, atol=1e-2, rtol=1e-2)
    # exact (non-approx) normalization -> rows sum to 1 to float rounding
    assert jnp.allclose(jnp.sum(gates, axis=-1), 1.0, atol=1e-4)

    print("KERNEL_OK")
</pallas_src>

<mosaic_0001>
module attributes {stable_mosaic.version = 11 : i64} {
  func.func @_gating_kernel(%arg0: i32, %arg1: memref<16x16xbf16, #tpu.memory_space<vmem>>, %arg2: memref<16x32xbf16, #tpu.memory_space<vmem>>, %arg3: memref<1x32xf32, #tpu.memory_space<vmem>>, %arg4: memref<32x4xbf16, #tpu.memory_space<vmem>>, %arg5: memref<1x4xf32, #tpu.memory_space<vmem>>, %arg6: memref<16x4xf32, #tpu.memory_space<vmem>>) attributes {dimension_semantics = [#tpu.dimension_semantics<parallel>], iteration_bounds = array<i64: 1>, scalar_prefetch = 0 : i64, scratch_operands = 0 : i64, tpu.core_type = #tpu.core_type<tc>, window_params = [{transform_indices = @transform_0, window_bounds = array<i64: 16, 16>}, {pipeline_mode = #tpu.pipeline_mode<synchronous>, transform_indices = @transform_1, window_bounds = array<i64: 16, 32>}, {pipeline_mode = #tpu.pipeline_mode<synchronous>, transform_indices = @transform_2, window_bounds = array<i64: 1, 32>}, {pipeline_mode = #tpu.pipeline_mode<synchronous>, transform_indices = @transform_3, window_bounds = array<i64: 32, 4>}, {pipeline_mode = #tpu.pipeline_mode<synchronous>, transform_indices = @transform_4, window_bounds = array<i64: 1, 4>}, {transform_indices = @transform_5, window_bounds = array<i64: 16, 4>}]} {
    %c0 = arith.constant 0 : index
    %c0_0 = arith.constant 0 : index
    %0 = vector.load %arg1[%c0, %c0_0] : memref<16x16xbf16, #tpu.memory_space<vmem>>, vector<16x16xbf16>
    %c0_1 = arith.constant 0 : index
    %c0_2 = arith.constant 0 : index
    %1 = vector.load %arg2[%c0_1, %c0_2] : memref<16x32xbf16, #tpu.memory_space<vmem>>, vector<16x32xbf16>
    %cst = arith.constant dense<0.000000e+00> : vector<16x32xf32>
    %2 = tpu.matmul %0, %1, %cst {dimension_numbers = #tpu.dot_dimension_numbers<[1], [0], [0], [1], [0, 0, 1, 1], [], []>} : vector<16x16xbf16>, vector<16x32xbf16>, vector<16x32xf32> -> vector<16x32xf32>
    %c0_3 = arith.constant 0 : index
    %c0_4 = arith.constant 0 : index
    %3 = vector.load %arg3[%c0_3, %c0_4] : memref<1x32xf32, #tpu.memory_space<vmem>>, vector<1x32xf32>
    %4 = vector.broadcast %3 : vector<1x32xf32> to vector<16x32xf32>
    %5 = arith.addf %2, %4 : vector<16x32xf32>
    %cst_5 = arith.constant 0.000000e+00 : f32
    %6 = vector.broadcast %cst_5 : f32 to vector<16x32xf32>
    %7 = arith.maximumf %5, %6 : vector<16x32xf32>
    %8 = arith.truncf %7 : vector<16x32xf32> to vector<16x32xbf16>
    %c0_6 = arith.constant 0 : index
    %c0_7 = arith.constant 0 : index
    %9 = vector.load %arg4[%c0_6, %c0_7] : memref<32x4xbf16, #tpu.memory_space<vmem>>, vector<32x4xbf16>
    %cst_8 = arith.constant dense<0.000000e+00> : vector<16x4xf32>
    %10 = tpu.matmul %8, %9, %cst_8 {dimension_numbers = #tpu.dot_dimension_numbers<[1], [0], [0], [1], [0, 0, 1, 1], [], []>} : vector<16x32xbf16>, vector<32x4xbf16>, vector<16x4xf32> -> vector<16x4xf32>
    %c0_9 = arith.constant 0 : index
    %c0_10 = arith.constant 0 : index
    %11 = vector.load %arg5[%c0_9, %c0_10] : memref<1x4xf32, #tpu.memory_space<vmem>>, vector<1x4xf32>
    %12 = vector.broadcast %11 : vector<1x4xf32> to vector<16x4xf32>
    %13 = arith.addf %10, %12 : vector<16x4xf32>
    %cst_11 = arith.constant dense<0xFF800000> : vector<16xf32>
    %14 = vector.multi_reduction <maximumf>, %13, %cst_11 [1] : vector<16x4xf32> to vector<16xf32>
    %15 = vector.shape_cast %14 : vector<16xf32> to vector<16x1xf32>
    %16 = vector.broadcast %15 : vector<16x1xf32> to vector<16x4xf32>
    %17 = arith.subf %13, %16 : vector<16x4xf32>
    %18 = math.exp %17 : vector<16x4xf32>
    %cst_12 = arith.constant dense<0.000000e+00> : vector<16xf32>
    %19 = vector.multi_reduction <add>, %18, %cst_12 [1] : vector<16x4xf32> to vector<16xf32>
    %20 = vector.shape_cast %19 : vector<16xf32> to vector<16x1xf32>
    %21 = vector.broadcast %20 : vector<16x1xf32> to vector<16x4xf32>
    %22 = arith.divf %18, %21 : vector<16x4xf32>
    %c0_13 = arith.constant 0 : index
    %c0_14 = arith.constant 0 : index
    %23 = vector.load %arg6[%c0_13, %c0_14] : memref<16x4xf32, #tpu.memory_space<vmem>>, vector<16x4xf32>
    tpu.vector_store %arg6[%c0_13, %c0_14], %22 {strides = array<i32>} : memref<16x4xf32, #tpu.memory_space<vmem>>, vector<16x4xf32>,
    return
  }
  func.func @transform_0(%arg0: i32) -> (i32, i32) {
    %c0_i32 = arith.constant 0 : i32
    %c0_i32_0 = arith.constant 0 : i32
    return %arg0, %c0_i32 : i32, i32
  }
  func.func @transform_1(%arg0: i32) -> (i32, i32) {
    %c0_i32 = arith.constant 0 : i32
    %c0_i32_0 = arith.constant 0 : i32
    %c0_i32_1 = arith.constant 0 : i32
    return %c0_i32, %c0_i32_0 : i32, i32
  }
  func.func @transform_2(%arg0: i32) -> (i32, i32) {
    %c0_i32 = arith.constant 0 : i32
    %c0_i32_0 = arith.constant 0 : i32
    %c0_i32_1 = arith.constant 0 : i32
    return %c0_i32, %c0_i32_0 : i32, i32
  }
  func.func @transform_3(%arg0: i32) -> (i32, i32) {
    %c0_i32 = arith.constant 0 : i32
    %c0_i32_0 = arith.constant 0 : i32
    %c0_i32_1 = arith.constant 0 : i32
    return %c0_i32, %c0_i32_0 : i32, i32
  }
  func.func @transform_4(%arg0: i32) -> (i32, i32) {
    %c0_i32 = arith.constant 0 : i32
    %c0_i32_0 = arith.constant 0 : i32
    %c0_i32_1 = arith.constant 0 : i32
    return %c0_i32, %c0_i32_0 : i32, i32
  }
  func.func @transform_5(%arg0: i32) -> (i32, i32) {
    %c0_i32 = arith.constant 0 : i32
    %c0_i32_0 = arith.constant 0 : i32
    return %arg0, %c0_i32 : i32, i32
  }
}

</mosaic_0001>

<llo_original>
// kernel: tpu_custom_call.1
$region0: #{tpu_custom_call.1}
  #allocation0 [shape = 'u32[]', space=smem, size = 0x4, offset = 0x4, fixed_abs, tag = 'smem constant byte address 0x4 - core index']
  #allocation1 [shape = 'u32[144,128]{1,0:T(1,128)}', space=vmem, size = 0x12000, scoped, tag = 'internal scratch']
  %s0 = inlined_call_operand.vmem [shape: bf16[16,16], index: 0, kind: input, shape index: {}]
  %s1 = inlined_call_operand.vmem [shape: bf16[16,32], index: 1, kind: input, shape index: {}]
  %s2 = inlined_call_operand.vmem [shape: f32[1,32], index: 2, kind: input, shape index: {}]
  %s3 = inlined_call_operand.vmem [shape: bf16[32,4], index: 3, kind: input, shape index: {}]
  %s4 = inlined_call_operand.vmem [shape: f32[1,4], index: 4, kind: input, shape index: {}]
  %s5 = inlined_call_operand.vmem [shape: f32[16,4], index: 5, kind: output, shape index: {}]
  %s6 = sld [smem:[#allocation0]]
  $region30: #{tpu_custom_call.1} parent=0
    _
  %s8 = ssub.s32 1, %s6
  %s9 = scalar_select 0, %s8, %s6
  // Predicated region
  $region2: #{tpu_custom_call.1} parent=0 // pred_check
    _
  $region3: #{tpu_custom_call.1} parent=0 // pred_check_branch
    %11 = sbr.rel (0) target = $region5
  $region4: #{tpu_custom_call.1} parent=0 // pred_region
    _
  $region5: #{tpu_custom_call.1} parent=0 // pred_fallthru
    _
  // Predicated region
  $region6: #{tpu_custom_call.1} parent=0 // pred_check
    _
  $region7: #{tpu_custom_call.1} parent=0 // pred_check_branch
    %13 = sbr.rel (0) target = $region9
  $region8: #{tpu_custom_call.1} parent=0 // pred_region
    _
  $region9: #{tpu_custom_call.1} parent=0 // pred_fallthru
    _
  // Predicated region
  $region10: #{tpu_custom_call.1} parent=0 // pred_check
    _
  $region11: #{tpu_custom_call.1} parent=0 // pred_check_branch
    %15 = sbr.rel (0) target = $region13
  $region12: #{tpu_custom_call.1} parent=0 // pred_region
    _
  $region13: #{tpu_custom_call.1} parent=0 // pred_fallthru
    _
  // Predicated region
  $region14: #{tpu_custom_call.1} parent=0 // pred_check
    _
  $region15: #{tpu_custom_call.1} parent=0 // pred_check_branch
    %17 = sbr.rel (0) target = $region17
  $region16: #{tpu_custom_call.1} parent=0 // pred_region
    _
  $region17: #{tpu_custom_call.1} parent=0 // pred_fallthru
    _
  // Predicated region
  $region18: #{tpu_custom_call.1} parent=0 // pred_check
    _
  $region19: #{tpu_custom_call.1} parent=0 // pred_check_branch
    %19 = sbr.rel (0) target = $region21
  $region20: #{tpu_custom_call.1} parent=0 // pred_region
    _
  $region21: #{tpu_custom_call.1} parent=0 // pred_fallthru
    _
  %v21 = vld [vmem:[%s0] sm:$0xf]
  %v22 = vld [vmem:[%s0 + $0x4] sm:$0xf]
  %v23 = vld [vmem:[%s1] sm:$0xf]
  %v24 = vld [vmem:[%s1 + $0x4] sm:$0xf]
  %v25 = vld [vmem:[%s2] sm:$0x1]
  %v27 = vlaneseq
  %v28 = vshrl.u32 %v27, 7
  %v29 = vsub.s32 0, %v28
  %v30 = vrot.slane %v25, %v29
  %v34 = vunpack.c.l.b16 %v21
  %v35 = vunpack.c.l.b16 %v22
  %v36 = vpack.c.b16 %v35, %v34
  %v39 = vunpack.c.l.b16 %v23
  %v40 = vunpack.c.l.b16 %v24
  %v41 = vpack.c.b16 %v40, %v39
  %vm43 = vcmask 130048
  %v45 = vsel %vm43, %v36, 0
  %47 = vmatprep.subr.bf16.mxu0 0
  %48 = vmatpush1.bf16.msra.mxu0 %v41
  %49 = vmatprep.subr.bf16.mxu0 0
  %50 = vmatpush1.bf16.msra.mxu0 0
  %51 = vmatprep.subr.bf16.mxu0 0
  %52 = vmatpush1.bf16.msra.mxu0 0
  %53 = vmatprep.subr.bf16.mxu0 0
  %54 = vmatpush1.bf16.msra.mxu0 0
  %55 = vmatprep.subr.bf16.mxu0 0
  %56 = vmatpush1.bf16.msra.mxu0 0
  %57 = vmatprep.subr.bf16.mxu0 0
  %58 = vmatpush1.bf16.msra.mxu0 0
  %59 = vmatprep.subr.bf16.mxu0 0
  %60 = vmatpush1.bf16.msra.mxu0 0
  %61 = vmatprep.subr.bf16.mxu0 0
  %62 = vmatpush1.bf16.msra.mxu0 0
  %63 = vmatprep.subr.bf16.mxu0 0
  %64 = vmatpush1.bf16.msra.mxu0 0
  %65 = vmatprep.subr.bf16.mxu0 0
  %66 = vmatpush1.bf16.msra.mxu0 0
  %67 = vmatprep.subr.bf16.mxu0 0
  %68 = vmatpush1.bf16.msra.mxu0 0
  %69 = vmatprep.subr.bf16.mxu0 0
  %70 = vmatpush1.bf16.msra.mxu0 0
  %71 = vmatprep.subr.bf16.mxu0 0
  %72 = vmatpush1.bf16.msra.mxu0 0
  %73 = vmatprep.subr.bf16.mxu0 0
  %74 = vmatpush1.bf16.msra.mxu0 0
  %75 = vmatprep.subr.bf16.mxu0 0
  %76 = vmatpush1.bf16.msra.mxu0 0
  %77 = vmatprep.subr.bf16.mxu0 0
  %78 = vmatpush1.bf16.msra.mxu0 0
  %79 = vmatprep.mubr.bf16.mxu0 0
  %80 = vmatmul.mubr.bf16.gmra.mrb[0].mxu0 %v45
  %v81 = vpop.f32.mrb[0].mxu0
  %v82 = vadd.f32 %v30, %v81
  %v83 = vpop.f32.mrb[0].mxu0
  %v84 = vpop.f32.mrb[0].mxu0
  %v85 = vadd.f32 %v30, %v84
  %v86 = vpop.f32.mrb[0].mxu0
  %87 = vdwg.mxu0
  %v88 = vmax.f32 %v82, 0.0
  %v89 = vmax.f32 %v85, 0.0
  %v90 = vpack.c.bf16 %v89, %v88
  %v91 = vld [vmem:[%s3] sm:$0xf]
  %v92 = vld [vmem:[%s3 + $0x4] sm:$0xf]
  %v93 = vld [vmem:[%s3 + $0x8] sm:$0xf]
  %v94 = vld [vmem:[%s3 + $0xc] sm:$0xf]
  %v95 = vld [vmem:[%s4] sm:$0x1]
  %v97 = vlaneseq
  %v98 = vshrl.u32 %v97, 7
  %v99 = vsub.s32 0, %v98
  %v100 = vrot.slane %v95, %v99
  %v106 = vunpack.c.l.b16 %v91
  %v107 = vunpack.c.l.b16 %v92
  %v108 = vunpack.c.l.b16 %v93
  %v109 = vunpack.c.l.b16 %v94
  %v110 = vpack.c.b16 %v107, %v106
  %v111 = vpack.c.b16 %v109, %v108
  %vm114 = vcmask 261120
  %v116 = vsel %vm114, %v90, 0
  %118 = vmatprep.subr.bf16.mxu0 0
  %119 = vmatpush1.bf16.msra.mxu0 %v110
  %120 = vmatprep.subr.bf16.mxu0 0
  %121 = vmatpush1.bf16.msra.mxu0 %v111
  %122 = vmatprep.subr.bf16.mxu0 0
  %123 = vmatpush1.bf16.msra.mxu0 0
  %124 = vmatprep.subr.bf16.mxu0 0
  %125 = vmatpush1.bf16.msra.mxu0 0
  %126 = vmatprep.subr.bf16.mxu0 0
  %127 = vmatpush1.bf16.msra.mxu0 0
  %128 = vmatprep.subr.bf16.mxu0 0
  %129 = vmatpush1.bf16.msra.mxu0 0
  %130 = vmatprep.subr.bf16.mxu0 0
  %131 = vmatpush1.bf16.msra.mxu0 0
  %132 = vmatprep.subr.bf16.mxu0 0
  %133 = vmatpush1.bf16.msra.mxu0 0
  %134 = vmatprep.subr.bf16.mxu0 0
  %135 = vmatpush1.bf16.msra.mxu0 0
  %136 = vmatprep.subr.bf16.mxu0 0
  %137 = vmatpush1.bf16.msra.mxu0 0
  %138 = vmatprep.subr.bf16.mxu0 0
  %139 = vmatpush1.bf16.msra.mxu0 0
  %140 = vmatprep.subr.bf16.mxu0 0
  %141 = vmatpush1.bf16.msra.mxu0 0
  %142 = vmatprep.subr.bf16.mxu0 0
  %143 = vmatpush1.bf16.msra.mxu0 0
  %144 = vmatprep.subr.bf16.mxu0 0
  %145 = vmatpush1.bf16.msra.mxu0 0
  %146 = vmatprep.subr.bf16.mxu0 0
  %147 = vmatpush1.bf16.msra.mxu0 0
  %148 = vmatprep.subr.bf16.mxu0 0
  %149 = vmatpush1.bf16.msra.mxu0 0
  %150 = vmatprep.mubr.bf16.mxu0 0
  %151 = vmatmul.mubr.bf16.gmra.mrb[0].mxu0 %v116
  %v152 = vpop.f32.mrb[0].mxu0
  %v153 = vadd.f32 %v100, %v152
  %v154 = vpop.f32.mrb[0].mxu0
  %v155 = vpop.f32.mrb[0].mxu0
  %v156 = vadd.f32 %v100, %v155
  %v157 = vpop.f32.mrb[0].mxu0
  %158 = vdwg.mxu0
  %vm159 = vcmask 31744
  %v160 = vsel %vm159, %v153, -inf
  %161 = vmax.xlane.f32.xlu0 %v160
  %v162 = vpop.xlane.xlu0 %161
  %v163 = vsel %vm159, %v156, -inf
  %164 = vmax.xlane.f32.xlu0 %v163
  %v165 = vpop.xlane.xlu0 %164
  %v166 = vsub.f32 %v153, %v162
  %v167 = vsub.f32 %v156, %v165
  %v168 = vmul.f32 %v166, 1.442695
  %v169 = vpow.pop %v168
  %v170 = vmul.f32 %v167, 1.442695
  %v171 = vpow.pop %v170
  %v172 = vsel %vm159, %v169, 0.0
  %173 = vadd.xlane.f32.xlu0 %v172
  %v174 = vpop.xlane.xlu0 %173
  %v175 = vsel %vm159, %v171, 0.0
  %176 = vadd.xlane.f32.xlu0 %v175
  %v177 = vpop.xlane.xlu0 %176
  %v178 = vrcp.pop %v174
  %v179 = vmul.f32 %v169, %v178
  %v180 = vrcp.pop %v177
  %v181 = vmul.f32 %v171, %v180
  %182 = vst.msk [vmem:[%s5] sm:$0xff] %vm159, %v179
  %183 = vst.msk [vmem:[%s5 + $0x8] sm:$0xff] %vm159, %v181
  // Predicated region
  $region22: #{tpu_custom_call.1} parent=0 // pred_check
    _
  $region23: #{tpu_custom_call.1} parent=0 // pred_check_branch
    %185 = sbr.rel (0) target = $region25
  $region24: #{tpu_custom_call.1} parent=0 // pred_region
    _
  $region25: #{tpu_custom_call.1} parent=0 // pred_fallthru
    _
  // Predicated region
  $region26: #{tpu_custom_call.1} parent=0 // pred_check
    _
  $region27: #{tpu_custom_call.1} parent=0 // pred_check_branch
    %187 = sbr.rel (0) target = $region29
  $region28: #{tpu_custom_call.1} parent=0 // pred_region
    _
  $region29: #{tpu_custom_call.1} parent=0 // pred_fallthru
    _

</llo_original>
